<compile_context>
chip_gen: v7x
topology: tpu7x:2x2x1
jax: 0.10.0
libtpu: 0.0.40
codegen_flags: <defaults>
</compile_context>

<pallas_src>
import functools

import jax
import jax.numpy as jnp
from jax.experimental import pallas as pl
from jax.experimental.pallas import tpu as pltpu


def _round_up(x, m):
    return (x + m - 1) // m * m


def _patch_embed_kernel(p_ref, w_ref, b_ref, o_ref):
    # p_ref: (TM, K)  bf16 patch tile
    # w_ref: (K, TN)  bf16 flattened conv weight tile (VMEM-resident across the
    #                 inner M grid axis: its block index only depends on j)
    # b_ref: (1, TN)  f32 bias tile
    # o_ref: (TM, TN) f32 output tile (lane-dense, TN % 128 == 0)
    acc = jnp.dot(p_ref[...], w_ref[...], preferred_element_type=jnp.float32)
    o_ref[...] = (acc + b_ref[...]).astype(o_ref.dtype)


def patch_embed_matmul(patches, w_flat_t, bias, *, tm_target=256, tn_target=512):
    """patches: (M, K), w_flat_t: (K, N), bias: (1, N) -> (M, N) float32."""
    M, K = patches.shape
    K2, N = w_flat_t.shape
    assert K == K2

    # MXU-native bf16 operands, f32 accumulation + f32 bias / output.
    patches = patches.astype(jnp.bfloat16)
    w_flat_t = w_flat_t.astype(jnp.bfloat16)
    bias = bias.astype(jnp.float32)

    # Tile / padding plan:
    #   K (lane dim of patches, sublane dim of weight) -> multiple of 128
    #   N (lane dim of weight / output)                -> multiple of 128
    #   M tile TM                                      -> multiple of 16 (bf16 sublanes)
    TM = min(tm_target, _round_up(M, 16))
    TN = min(tn_target, _round_up(N, 128))
    Mp = _round_up(M, TM)
    Np = _round_up(N, TN)
    Kp = _round_up(K, 128)

    if (Mp, Kp) != (M, K):
        patches = jnp.pad(patches, ((0, Mp - M), (0, Kp - K)))
    if (Kp, Np) != (K, N):
        w_flat_t = jnp.pad(w_flat_t, ((0, Kp - K), (0, Np - N)))
    if Np != N:
        bias = jnp.pad(bias, ((0, 0), (0, Np - N)))

    # Inner (last) grid axis iterates M tiles; weight/bias block indices only
    # depend on j, so their tiles are not re-fetched between consecutive steps.
    grid = (Np // TN, Mp // TM)

    flops = 2 * Mp * Kp * Np
    bytes_accessed = Mp * Kp * 2 + Kp * Np * 2 + Np * 4 + Mp * Np * 4

    out = pl.pallas_call(
        _patch_embed_kernel,
        out_shape=jax.ShapeDtypeStruct((Mp, Np), jnp.float32),
        grid_spec=pltpu.PrefetchScalarGridSpec(
            num_scalar_prefetch=0,
            grid=grid,
            in_specs=[
                pl.BlockSpec((TM, Kp), lambda j, i: (i, 0)),
                pl.BlockSpec((Kp, TN), lambda j, i: (0, j)),
                pl.BlockSpec((1, TN), lambda j, i: (0, j)),
            ],
            out_specs=pl.BlockSpec((TM, TN), lambda j, i: (i, j)),
        ),
        compiler_params=pltpu.CompilerParams(
            dimension_semantics=("parallel", "parallel"),
            vmem_limit_bytes=48 * 1024 * 1024,  # fits v7x's 64 MiB physical VMEM
            allow_input_fusion=[True, True, True],
        ),
        cost_estimate=pl.CostEstimate(
            flops=flops, transcendentals=0, bytes_accessed=bytes_accessed),
    )(patches, w_flat_t, bias)

    if (Mp, Np) != (M, N):
        out = out[:M, :N]
    return out


def patch_embed_forward(x, weight, bias, patch_size):
    """x: (B, C, H, W) NCHW; weight: (E, C, ph, pw); bias: (E,).

    Returns (B, num_patches, E) matching PyTorch `proj(x).flatten(2).transpose(1, 2)`.
    """
    B, C, H, W = x.shape
    E = weight.shape[0]
    ph, pw = patch_size
    Hp, Wp = H // ph, W // pw
    num_patches = Hp * Wp

    # Patch extraction with inner dim order (c, kh, kw) to match the conv-weight
    # flattening. allow_input_fusion lets XLA fuse this transpose into the
    # kernel's input DMA instead of materializing an extra HBM copy.
    patches = x.reshape(B, C, Hp, ph, Wp, pw)
    patches = patches.transpose(0, 2, 4, 1, 3, 5)            # (B, Hp, Wp, C, ph, pw)
    patches = patches.reshape(B * num_patches, C * ph * pw)  # (M, K)

    w_flat_t = weight.reshape(E, C * ph * pw).T               # (K, E)
    bias2d = bias.reshape(1, E)

    out = patch_embed_matmul(patches, w_flat_t, bias2d)       # (M, E) f32
    return out.reshape(B, num_patches, E)


if __name__ == "__main__":
    # Small shapes consistent with the module: img_size=16, patch_size=4,
    # in_chans=4, embed_dim=32  ->  num_patches = (16/4)*(16/4) = 16.
    B, C, H, W = 2, 4, 16, 16
    ph, pw = 4, 4
    E = 32

    key = jax.random.PRNGKey(0)
    kx, kw, kb = jax.random.split(key, 3)

    x = jax.random.normal(kx, (B, C, H, W), dtype=jnp.float32)
    weight = jax.random.normal(kw, (E, C, ph, pw), dtype=jnp.float32) * 0.02
    bias = jax.random.normal(kb, (E,), dtype=jnp.float32) * 0.02

    fwd = jax.jit(functools.partial(patch_embed_forward, patch_size=(ph, pw)))
    y = fwd(x, weight, bias)
    y = jax.block_until_ready(y)

    # Reference: same math with bf16-rounded operands and f32 accumulation
    # (matches the kernel's MXU numerics; exact Conv2d-as-patch-matmul identity).
    patches_ref = x.reshape(B, C, H // ph, ph, W // pw, pw)
    patches_ref = patches_ref.transpose(0, 2, 4, 1, 3, 5).reshape(B, -1, C * ph * pw)
    p_bf = patches_ref.astype(jnp.bfloat16).astype(jnp.float32)
    w_bf = weight.reshape(E, -1).astype(jnp.bfloat16).astype(jnp.float32)
    ref = jnp.einsum("bpk,ek->bpe", p_bf, w_bf,
                     precision=jax.lax.Precision.HIGHEST) + bias

    assert y.shape == (B, (H // ph) * (W // pw), E)
    assert jnp.allclose(y, ref, atol=2e-3, rtol=2e-3), float(jnp.max(jnp.abs(y - ref)))

    print("KERNEL_OK")
</pallas_src>

<mosaic_0001>
module attributes {stable_mosaic.version = 11 : i64} {
  func.func @_patch_embed_kernel(%arg0: i32, %arg1: i32, %arg2: memref<32x128xbf16, #tpu.memory_space<vmem>>, %arg3: memref<128x128xbf16, #tpu.memory_space<vmem>>, %arg4: memref<1x128xf32, #tpu.memory_space<vmem>>, %arg5: memref<32x128xf32, #tpu.memory_space<vmem>>) attributes {dimension_semantics = [#tpu.dimension_semantics<parallel>, #tpu.dimension_semantics<parallel>], iteration_bounds = array<i64: 1, 1>, scalar_prefetch = 0 : i64, scratch_operands = 0 : i64, tpu.core_type = #tpu.core_type<tc>, window_params = [{transform_indices = @transform_0, window_bounds = array<i64: 32, 128>}, {transform_indices = @transform_1, window_bounds = array<i64: 128, 128>}, {transform_indices = @transform_2, window_bounds = array<i64: 1, 128>}, {transform_indices = @transform_3, window_bounds = array<i64: 32, 128>}]} {
    %c0 = arith.constant 0 : index
    %c0_0 = arith.constant 0 : index
    %0 = vector.load %arg2[%c0, %c0_0] : memref<32x128xbf16, #tpu.memory_space<vmem>>, vector<32x128xbf16>
    %c0_1 = arith.constant 0 : index
    %c0_2 = arith.constant 0 : index
    %1 = vector.load %arg3[%c0_1, %c0_2] : memref<128x128xbf16, #tpu.memory_space<vmem>>, vector<128x128xbf16>
    %cst = arith.constant dense<0.000000e+00> : vector<32x128xf32>
    %2 = tpu.matmul %0, %1, %cst {dimension_numbers = #tpu.dot_dimension_numbers<[1], [0], [0], [1], [0, 0, 1, 1], [], []>} : vector<32x128xbf16>, vector<128x128xbf16>, vector<32x128xf32> -> vector<32x128xf32>
    %c0_3 = arith.constant 0 : index
    %c0_4 = arith.constant 0 : index
    %3 = vector.load %arg4[%c0_3, %c0_4] : memref<1x128xf32, #tpu.memory_space<vmem>>, vector<1x128xf32>
    %4 = vector.broadcast %3 : vector<1x128xf32> to vector<32x128xf32>
    %5 = arith.addf %2, %4 : vector<32x128xf32>
    %c0_5 = arith.constant 0 : index
    %c0_6 = arith.constant 0 : index
    %6 = vector.load %arg5[%c0_5, %c0_6] : memref<32x128xf32, #tpu.memory_space<vmem>>, vector<32x128xf32>
    tpu.vector_store %arg5[%c0_5, %c0_6], %5 {strides = array<i32>} : memref<32x128xf32, #tpu.memory_space<vmem>>, vector<32x128xf32>,
    return
  }
  func.func @transform_0(%arg0: i32, %arg1: i32) -> (i32, i32) {
    %c0_i32 = arith.constant 0 : i32
    %c0_i32_0 = arith.constant 0 : i32
    return %arg1, %c0_i32 : i32, i32
  }
  func.func @transform_1(%arg0: i32, %arg1: i32) -> (i32, i32) {
    %c0_i32 = arith.constant 0 : i32
    %c0_i32_0 = arith.constant 0 : i32
    return %c0_i32, %arg0 : i32, i32
  }
  func.func @transform_2(%arg0: i32, %arg1: i32) -> (i32, i32) {
    %c0_i32 = arith.constant 0 : i32
    %c0_i32_0 = arith.constant 0 : i32
    return %c0_i32, %arg0 : i32, i32
  }
  func.func @transform_3(%arg0: i32, %arg1: i32) -> (i32, i32) {
    %c0_i32 = arith.constant 0 : i32
    return %arg1, %arg0 : i32, i32
  }
}

</mosaic_0001>

<llo_original>
// kernel: patch_embed_forward.2
$region0: #{patch_embed_forward.2}
  #allocation0 [shape = 'u32[]', space=smem, size = 0x4, offset = 0x4, fixed_abs, tag = 'smem constant byte address 0x4 - core index']
  #allocation1 [shape = 'u32[144,128]{1,0:T(1,128)}', space=vmem, size = 0x12000, scoped, tag = 'internal scratch']
  #allocation2 [shape = 'u32[2048]{0}', space=vmem, size = 0x2000, scoped, tag = 'scoped memory for patch_embed_forward.2']
  #allocation3 [shape = 'u32[2048]{0}', space=vmem, size = 0x2000, scoped, tag = 'scoped memory for patch_embed_forward.2']
  #allocation4 [shape = 'u32[2048]{0}', space=vmem, size = 0x2000, scoped, tag = 'scoped memory for patch_embed_forward.2']
  #allocation5 [shape = 'u32[2048]{0}', space=vmem, size = 0x2000, scoped, tag = 'scoped memory for patch_embed_forward.2']
  #allocation6 [shape = 'u32[2048]{0}', space=vmem, size = 0x2000, scoped, tag = 'scoped memory for patch_embed_forward.2']
  #allocation7 [shape = 'u32[2048]{0}', space=vmem, size = 0x2000, scoped, tag = 'scoped memory for patch_embed_forward.2']
  #allocation8 [shape = 'u32[2048]{0}', space=vmem, size = 0x2000, scoped, tag = 'scoped memory for patch_embed_forward.2']
  #allocation9 [shape = 'u32[2048]{0}', space=vmem, size = 0x2000, scoped, tag = 'scoped memory for patch_embed_forward.2']
  #allocation10 [shape = 'u32[2048]{0}', space=vmem, size = 0x2000, scoped, tag = 'scoped memory for patch_embed_forward.2']
  #allocation11 [shape = 'u32[2048]{0}', space=vmem, size = 0x2000, scoped, tag = 'scoped memory for patch_embed_forward.2']
  #allocation12 [shape = 'u32[2048]{0}', space=vmem, size = 0x2000, scoped, tag = 'scoped memory for patch_embed_forward.2']
  #allocation13 [shape = 'u32[2048]{0}', space=vmem, size = 0x2000, scoped, tag = 'scoped memory for patch_embed_forward.2']
  #allocation14 [shape = 'u32[2048]{0}', space=vmem, size = 0x2000, scoped, tag = 'scoped memory for patch_embed_forward.2']
  #allocation15 [shape = 'u32[2048]{0}', space=vmem, size = 0x2000, scoped, tag = 'scoped memory for patch_embed_forward.2']
  #allocation16 [shape = 'u32[2048]{0}', space=vmem, size = 0x2000, scoped, tag = 'scoped memory for patch_embed_forward.2']
  %s0 = inlined_call_operand.vmem [shape: bf16[64,32], index: 0, kind: input, shape index: {}]
  %s1 = inlined_call_operand.<no memory space> [shape: bf16[], index: 1, kind: input, shape index: {}]
  %s2 = inlined_call_operand.vmem [shape: bf16[32,64], index: 2, kind: input, shape index: {}]
  %s3 = inlined_call_operand.vmem [shape: f32[1,32], index: 3, kind: input, shape index: {}]
  %s4 = inlined_call_operand.<no memory space> [shape: f32[], index: 4, kind: input, shape index: {}]
  %s5 = inlined_call_operand.hbm [shape: f32[32,128], index: 5, kind: output, shape index: {}]
  %s6 = sld [smem:[#allocation0]]
  $region22: #{patch_embed_forward.2} parent=0
    _
  %s8 = ssub.s32 1, %s6
  %s9 = scalar_select 0, %s8, %s6
  %v10 = vstv %s1
  %v11 = vunpack.i.l.bf16 %v10
  %v13 = vunpack.i.h.bf16 %v10
  %v15 = vstv %s1
  %v16 = vunpack.i.l.bf16 %v15
  %v18 = vunpack.i.h.bf16 %v15
  %v20 = vstv %s4
  $region1: #{patch_embed_forward.2} parent=0
    #allocation17 [shape = 'u8[16384]{0}', space=vmem, size = 0x4000, scoped, tag = 'output window, operand 0, single buffered']
    #allocation18 [shape = 's32[1]{0}', space=sflag, size = 0x4, scoped, tag = 'scoped memory for patch_embed_forward.2']
    #allocation19 [shape = 'u8[8192]{0}', space=vmem, size = 0x2000, dematerialized = true, scoped, tag = 'FusionAdapter Buffer %fusion.2 = bf16[32,128]{1,0:T(8,128)(2,1)} fusion(%param_2.3, %param_1.5), kind=kLoop, calls=%fused_computation.3.clone, metadata={op_name="jit(patch_embed_forward)/jit(_pad)/pad" stack_frame_id=16}']
    #allocation20 [shape = 'u8[32768]{0}', space=vmem, size = 0x8000, dematerialized = true, scoped, tag = 'FusionAdapter Buffer %fusion.1 = bf16[128,128]{1,0:T(8,128)(2,1)} fusion(%param_0.6, %param_1.5), kind=kLoop, calls=%fused_computation.2.clone, metadata={op_name="jit(patch_embed_forward)/jit(_pad)/pad" stack_frame_id=17}']
    #allocation21 [shape = 'u8[512]{0}', space=vmem, size = 0x400, dematerialized = true, scoped, tag = 'FusionAdapter Buffer %fusion.3 = f32[1,128]{1,0:T(1,128)} fusion(%param_3.2, %param_4), kind=kLoop, calls=%fused_computation.4.clone, metadata={op_name="jit(patch_embed_forward)/jit(_pad)/pad" stack_frame_id=18}']
    %21 = vsyncpa [#allocation18], 0
    // Predicated region
    $region2: #{patch_embed_forward.2} parent=1 // pred_check
      _
    $region3: #{patch_embed_forward.2} parent=1 // pred_check_branch
      %23 = sbr.rel (0) target = $region5
    $region4: #{patch_embed_forward.2} parent=1 // pred_region
      _
    $region5: #{patch_embed_forward.2} parent=1 // pred_fallthru
      _
    // Predicated region
    $region6: #{patch_embed_forward.2} parent=1 // pred_check
      _
    $region7: #{patch_embed_forward.2} parent=1 // pred_check_branch
      %25 = sbr.rel (0) target = $region9
    $region8: #{patch_embed_forward.2} parent=1 // pred_region
      _
    $region9: #{patch_embed_forward.2} parent=1 // pred_fallthru
      _
    // Predicated region
    $region10: #{patch_embed_forward.2} parent=1 // pred_check
      _
    $region11: #{patch_embed_forward.2} parent=1 // pred_check_branch
      %27 = sbr.rel (0) target = $region13
    $region12: #{patch_embed_forward.2} parent=1 // pred_region
      _
    $region13: #{patch_embed_forward.2} parent=1 // pred_fallthru
      _
    %s29 = sor.u32 255, 127
    %s30 = sand.u32 %s29, 85
    %s31 = sshrl.u32 %s30, 1
    %s32 = sor.u32 %s30, %s31
    %s33 = sand.u32 51, %s32
    %s34 = sshrl.u32 %s33, 2
    %s35 = sor.u32 %s33, %s34
    %s36 = sand.u32 15, %s35
    %v37 = vld [vmem:[%s2] sm:%s36]
    %v38 = vunpack.c.l.bf16 %v37
    %v39 = vunpack.c.h.bf16 %v37
    %v40 = vlaneseq
    %v41 = vand.u32 %v40, 127
    %vm43 = vcmp.lt.s32.totalorder %v41, 64
    %v44 = vsel %vm43, %v38, %v11
    %v45 = vpack.c.bf16 0.0, %v44
    %47 = vst [vmem:[#allocation19] sm:$0xf] %v45
    %s48 = scalar_lea.vmem %s2, 4
    %s50 = sor.u32 255, 127
    %s51 = sand.u32 %s50, 85
    %s52 = sshrl.u32 %s51, 1
    %s53 = sor.u32 %s51, %s52
    %s54 = sand.u32 51, %s53
    %s55 = sshrl.u32 %s54, 2
    %s56 = sor.u32 %s54, %s55
    %s57 = sand.u32 15, %s56
    %v58 = vld [vmem:[%s48] sm:%s57]
    %v59 = vunpack.c.l.bf16 %v58
    %v60 = vunpack.c.h.bf16 %v58
    %v61 = vlaneseq
    %v62 = vand.u32 %v61, 127
    %vm64 = vcmp.lt.s32.totalorder %v62, 64
    %v65 = vsel %vm64, %v59, %v11
    %s66 = scalar_lea.vmem [#allocation19], 4
    %v67 = vpack.c.bf16 0.0, %v65
    %69 = vst [vmem:[%s66] sm:$0xf] %v67
    %s70 = scalar_lea.vmem %s2, 8
    %s72 = sor.u32 255, 127
    %s73 = sand.u32 %s72, 85
    %s74 = sshrl.u32 %s73, 1
    %s75 = sor.u32 %s73, %s74
    %s76 = sand.u32 51, %s75
    %s77 = sshrl.u32 %s76, 2
    %s78 = sor.u32 %s76, %s77
    %s79 = sand.u32 15, %s78
    %v80 = vld [vmem:[%s70] sm:%s79]
    %v81 = vunpack.c.l.bf16 %v80
    %v82 = vunpack.c.h.bf16 %v80
    %v83 = vlaneseq
    %v84 = vand.u32 %v83, 127
    %vm86 = vcmp.lt.s32.totalorder %v84, 64
    %v87 = vsel %vm86, %v81, %v11
    %s88 = scalar_lea.vmem [#allocation19], 8
    %v89 = vpack.c.bf16 0.0, %v87
    %91 = vst [vmem:[%s88] sm:$0xf] %v89
    %s92 = scalar_lea.vmem %s2, 12
    %s94 = sor.u32 255, 127
    %s95 = sand.u32 %s94, 85
    %s96 = sshrl.u32 %s95, 1
    %s97 = sor.u32 %s95, %s96
    %s98 = sand.u32 51, %s97
    %s99 = sshrl.u32 %s98, 2
    %s100 = sor.u32 %s98, %s99
    %s101 = sand.u32 15, %s100
    %v102 = vld [vmem:[%s92] sm:%s101]
    %v103 = vunpack.c.l.bf16 %v102
    %v104 = vunpack.c.h.bf16 %v102
    %v105 = vlaneseq
    %v106 = vand.u32 %v105, 127
    %vm108 = vcmp.lt.s32.totalorder %v106, 64
    %v109 = vsel %vm108, %v103, %v11
    %s110 = scalar_lea.vmem [#allocation19], 12
    %v111 = vpack.c.bf16 0.0, %v109
    %113 = vst [vmem:[%s110] sm:$0xf] %v111
    %s115 = sor.u32 255, 127
    %s116 = sand.u32 %s115, 85
    %s117 = sshrl.u32 %s116, 1
    %s118 = sor.u32 %s116, %s117
    %s119 = sand.u32 51, %s118
    %s120 = sshrl.u32 %s119, 2
    %s121 = sor.u32 %s119, %s120
    %s122 = sand.u32 15, %s121
    %v123 = vld [vmem:[%s0] sm:%s122]
    %v124 = vunpack.c.l.bf16 %v123
    %v125 = vunpack.c.h.bf16 %v123
    %v126 = vlaneseq
    %v127 = vand.u32 %v126, 127
    %vm129 = vcmp.lt.s32.totalorder %v127, 32
    %v130 = vsel %vm129, %v124, %v16
    %v131 = vpack.c.bf16 0.0, %v130
    %133 = vst [vmem:[#allocation20] sm:$0xf] %v131
    %s134 = scalar_lea.vmem %s0, 4
    %s136 = sor.u32 255, 127
    %s137 = sand.u32 %s136, 85
    %s138 = sshrl.u32 %s137, 1
    %s139 = sor.u32 %s137, %s138
    %s140 = sand.u32 51, %s139
    %s141 = sshrl.u32 %s140, 2
    %s142 = sor.u32 %s140, %s141
    %s143 = sand.u32 15, %s142
    %v144 = vld [vmem:[%s134] sm:%s143]
    %v145 = vunpack.c.l.bf16 %v144
    %v146 = vunpack.c.h.bf16 %v144
    %v147 = vlaneseq
    %v148 = vand.u32 %v147, 127
    %vm150 = vcmp.lt.s32.totalorder %v148, 32
    %v151 = vsel %vm150, %v145, %v16
    %s152 = scalar_lea.vmem [#allocation20], 4
    %v153 = vpack.c.bf16 0.0, %v151
    %155 = vst [vmem:[%s152] sm:$0xf] %v153
    %s156 = scalar_lea.vmem %s0, 8
    %s158 = sor.u32 255, 127
    %s159 = sand.u32 %s158, 85
    %s160 = sshrl.u32 %s159, 1
    %s161 = sor.u32 %s159, %s160
    %s162 = sand.u32 51, %s161
    %s163 = sshrl.u32 %s162, 2
    %s164 = sor.u32 %s162, %s163
    %s165 = sand.u32 15, %s164
    %v166 = vld [vmem:[%s156] sm:%s165]
    %v167 = vunpack.c.l.bf16 %v166
    %v168 = vunpack.c.h.bf16 %v166
    %v169 = vlaneseq
    %v170 = vand.u32 %v169, 127
    %vm172 = vcmp.lt.s32.totalorder %v170, 32
    %v173 = vsel %vm172, %v167, %v16
    %s174 = scalar_lea.vmem [#allocation20], 8
    %v175 = vpack.c.bf16 0.0, %v173
    %177 = vst [vmem:[%s174] sm:$0xf] %v175
    %s178 = scalar_lea.vmem %s0, 12
    %s180 = sor.u32 255, 127
    %s181 = sand.u32 %s180, 85
    %s182 = sshrl.u32 %s181, 1
    %s183 = sor.u32 %s181, %s182
    %s184 = sand.u32 51, %s183
    %s185 = sshrl.u32 %s184, 2
    %s186 = sor.u32 %s184, %s185
    %s187 = sand.u32 15, %s186
    %v188 = vld [vmem:[%s178] sm:%s187]
    %v189 = vunpack.c.l.bf16 %v188
    %v190 = vunpack.c.h.bf16 %v188
    %v191 = vlaneseq
    %v192 = vand.u32 %v191, 127
    %vm194 = vcmp.lt.s32.totalorder %v192, 32
    %v195 = vsel %vm194, %v189, %v16
    %s196 = scalar_lea.vmem [#allocation20], 12
    %v197 = vpack.c.bf16 0.0, %v195
    %199 = vst [vmem:[%s196] sm:$0xf] %v197
    %s200 = scalar_lea.vmem %s0, 16
    %s202 = sor.u32 255, 127
    %s203 = sand.u32 %s202, 85
    %s204 = sshrl.u32 %s203, 1
    %s205 = sor.u32 %s203, %s204
    %s206 = sand.u32 51, %s205
    %s207 = sshrl.u32 %s206, 2
    %s208 = sor.u32 %s206, %s207
    %s209 = sand.u32 15, %s208
    %v210 = vld [vmem:[%s200] sm:%s209]
    %v211 = vunpack.c.l.bf16 %v210
    %v212 = vunpack.c.h.bf16 %v210
    %v213 = vlaneseq
    %v214 = vand.u32 %v213, 127
    %vm216 = vcmp.lt.s32.totalorder %v214, 32
    %v217 = vsel %vm216, %v211, %v16
    %s218 = scalar_lea.vmem [#allocation20], 16
    %v219 = vpack.c.bf16 0.0, %v217
    %221 = vst [vmem:[%s218] sm:$0xf] %v219
    %s222 = scalar_lea.vmem %s0, 20
    %s224 = sor.u32 255, 127
    %s225 = sand.u32 %s224, 85
    %s226 = sshrl.u32 %s225, 1
    %s227 = sor.u32 %s225, %s226
    %s228 = sand.u32 51, %s227
    %s229 = sshrl.u32 %s228, 2
    %s230 = sor.u32 %s228, %s229
    %s231 = sand.u32 15, %s230
    %v232 = vld [vmem:[%s222] sm:%s231]
    %v233 = vunpack.c.l.bf16 %v232
    %v234 = vunpack.c.h.bf16 %v232
    %v235 = vlaneseq
    %v236 = vand.u32 %v235, 127
    %vm238 = vcmp.lt.s32.totalorder %v236, 32
    %v239 = vsel %vm238, %v233, %v16
    %s240 = scalar_lea.vmem [#allocation20], 20
    %v241 = vpack.c.bf16 0.0, %v239
    %243 = vst [vmem:[%s240] sm:$0xf] %v241
    %s244 = scalar_lea.vmem %s0, 24
    %s246 = sor.u32 255, 127
    %s247 = sand.u32 %s246, 85
    %s248 = sshrl.u32 %s247, 1
    %s249 = sor.u32 %s247, %s248
    %s250 = sand.u32 51, %s249
    %s251 = sshrl.u32 %s250, 2
    %s252 = sor.u32 %s250, %s251
    %s253 = sand.u32 15, %s252
    %v254 = vld [vmem:[%s244] sm:%s253]
    %v255 = vunpack.c.l.bf16 %v254
    %v256 = vunpack.c.h.bf16 %v254
    %v257 = vlaneseq
    %v258 = vand.u32 %v257, 127
    %vm260 = vcmp.lt.s32.totalorder %v258, 32
    %v261 = vsel %vm260, %v255, %v16
    %s262 = scalar_lea.vmem [#allocation20], 24
    %v263 = vpack.c.bf16 0.0, %v261
    %265 = vst [vmem:[%s262] sm:$0xf] %v263
    %s266 = scalar_lea.vmem %s0, 28
    %s268 = sor.u32 255, 127
    %s269 = sand.u32 %s268, 85
    %s270 = sshrl.u32 %s269, 1
    %s271 = sor.u32 %s269, %s270
    %s272 = sand.u32 51, %s271
    %s273 = sshrl.u32 %s272, 2
    %s274 = sor.u32 %s272, %s273
    %s275 = sand.u32 15, %s274
    %v276 = vld [vmem:[%s266] sm:%s275]
    %v277 = vunpack.c.l.bf16 %v276
    %v278 = vunpack.c.h.bf16 %v276
    %v279 = vlaneseq
    %v280 = vand.u32 %v279, 127
    %vm282 = vcmp.lt.s32.totalorder %v280, 32
    %v283 = vsel %vm282, %v277, %v16
    %s284 = scalar_lea.vmem [#allocation20], 28
    %v285 = vpack.c.bf16 0.0, %v283
    %287 = vst [vmem:[%s284] sm:$0xf] %v285
    %s288 = scalar_lea.vmem [#allocation20], 32
    %v289 = vpack.c.bf16 0.0, %v16
    %291 = vst [vmem:[%s288] sm:$0xf] %v289
    %s292 = scalar_lea.vmem [#allocation20], 36
    %v293 = vpack.c.bf16 0.0, %v16
    %295 = vst [vmem:[%s292] sm:$0xf] %v293
    %s296 = scalar_lea.vmem [#allocation20], 40
    %v297 = vpack.c.bf16 0.0, %v16
    %299 = vst [vmem:[%s296] sm:$0xf] %v297
    %s300 = scalar_lea.vmem [#allocation20], 44
    %v301 = vpack.c.bf16 0.0, %v16
    %303 = vst [vmem:[%s300] sm:$0xf] %v301
    %s304 = scalar_lea.vmem [#allocation20], 48
    %v305 = vpack.c.bf16 0.0, %v16
    %307 = vst [vmem:[%s304] sm:$0xf] %v305
    %s308 = scalar_lea.vmem [#allocation20], 52
    %v309 = vpack.c.bf16 0.0, %v16
    %311 = vst [vmem:[%s308] sm:$0xf] %v309
    %s312 = scalar_lea.vmem [#allocation20], 56
    %v313 = vpack.c.bf16 0.0, %v16
    %315 = vst [vmem:[%s312] sm:$0xf] %v313
    %s316 = scalar_lea.vmem [#allocation20], 60
    %v317 = vpack.c.bf16 0.0, %v16
    %319 = vst [vmem:[%s316] sm:$0xf] %v317
    %v320 = vld [vmem:[%s3] sm:$0x1]
    %v321 = vlaneseq
    %v322 = vshrl.u32 %v321, 7
    %vm324 = vcmp.lt.s32.totalorder %v322, 1
    %v325 = vsel %vm324, %v320, %v20
    %v326 = vlaneseq
    %v327 = vand.u32 %v326, 127
    %vm329 = vcmp.lt.s32.totalorder %v327, 32
    %v330 = vsel %vm329, %v325, %v20
    %332 = vst [vmem:[#allocation21] sm:$0x1] %v330
    %v334 = vld [vmem:[#allocation19] sm:$0xf]
    %v335 = vld [vmem:[#allocation19 + $0x4] sm:$0xf]
    %v336 = vld [vmem:[#allocation19 + $0x8] sm:$0xf]
    %v337 = vld [vmem:[#allocation19 + $0xc] sm:$0xf]
    %v338 = vld [vmem:[#allocation20] sm:$0xf]
    %v339 = vld [vmem:[#allocation20 + $0x4] sm:$0xf]
    %v340 = vld [vmem:[#allocation20 + $0x8] sm:$0xf]
    %v341 = vld [vmem:[#allocation20 + $0xc] sm:$0xf]
    %v342 = vld [vmem:[#allocation20 + $0x10] sm:$0xf]
    %v343 = vld [vmem:[#allocation20 + $0x14] sm:$0xf]
    %v344 = vld [vmem:[#allocation20 + $0x18] sm:$0xf]
    %v345 = vld [vmem:[#allocation20 + $0x1c] sm:$0xf]
    %v346 = vld [vmem:[#allocation20 + $0x20] sm:$0xf]
    %v347 = vld [vmem:[#allocation20 + $0x24] sm:$0xf]
    %v348 = vld [vmem:[#allocation20 + $0x28] sm:$0xf]
    %v349 = vld [vmem:[#allocation20 + $0x2c] sm:$0xf]
    %v350 = vld [vmem:[#allocation20 + $0x30] sm:$0xf]
    %v351 = vld [vmem:[#allocation20 + $0x34] sm:$0xf]
    %v352 = vld [vmem:[#allocation20 + $0x38] sm:$0xf]
    %v353 = vld [vmem:[#allocation20 + $0x3c] sm:$0xf]
    %v354 = vld [vmem:[#allocation21] sm:$0x1]
    %v356 = vlaneseq
    %v357 = vshrl.u32 %v356, 7
    %v358 = vsub.s32 0, %v357
    %v359 = vrot.slane %v354, %v358
    %v365 = vunpack.c.l.b16 %v334
    %v366 = vunpack.c.l.b16 %v335
    %v367 = vunpack.c.l.b16 %v336
    %v368 = vunpack.c.l.b16 %v337
    %v369 = vpack.c.b16 %v366, %v365
    %v370 = vpack.c.b16 %v368, %v367
    %v389 = vunpack.c.l.b16 %v338
    %v390 = vunpack.c.l.b16 %v339
    %v391 = vunpack.c.l.b16 %v340
    %v392 = vunpack.c.l.b16 %v341
    %v393 = vunpack.c.l.b16 %v342
    %v394 = vunpack.c.l.b16 %v343
    %v395 = vunpack.c.l.b16 %v344
    %v396 = vunpack.c.l.b16 %v345
    %v397 = vunpack.c.l.b16 %v346
    %v398 = vunpack.c.l.b16 %v347
    %v399 = vunpack.c.l.b16 %v348
    %v400 = vunpack.c.l.b16 %v349
    %v401 = vunpack.c.l.b16 %v350
    %v402 = vunpack.c.l.b16 %v351
    %v403 = vunpack.c.l.b16 %v352
    %v404 = vunpack.c.l.b16 %v353
    %v405 = vpack.c.b16 %v390, %v389
    %v406 = vpack.c.b16 %v392, %v391
    %v407 = vpack.c.b16 %v394, %v393
    %v408 = vpack.c.b16 %v396, %v395
    %v409 = vpack.c.b16 %v398, %v397
    %v410 = vpack.c.b16 %v400, %v399
    %v411 = vpack.c.b16 %v402, %v401
    %v412 = vpack.c.b16 %v404, %v403
    %421 = vmatprep.subr.bf16.mxu0 0
    %422 = vmatpush1.bf16.msra.mxu0 %v405
    %423 = vmatprep.subr.bf16.mxu0 0
    %424 = vmatpush1.bf16.msra.mxu0 %v406
    %425 = vmatprep.subr.bf16.mxu0 0
    %426 = vmatpush1.bf16.msra.mxu0 %v407
    %427 = vmatprep.subr.bf16.mxu0 0
    %428 = vmatpush1.bf16.msra.mxu0 %v408
    %429 = vmatprep.subr.bf16.mxu0 0
    %430 = vmatpush1.bf16.msra.mxu0 %v409
    %431 = vmatprep.subr.bf16.mxu0 0
    %432 = vmatpush1.bf16.msra.mxu0 %v410
    %433 = vmatprep.subr.bf16.mxu0 0
    %434 = vmatpush1.bf16.msra.mxu0 %v411
    %435 = vmatprep.subr.bf16.mxu0 0
    %436 = vmatpush1.bf16.msra.mxu0 %v412
    %437 = vmatprep.subr.bf16.mxu0 0
    %438 = vmatpush1.bf16.msra.mxu0 0
    %439 = vmatprep.subr.bf16.mxu0 0
    %440 = vmatpush1.bf16.msra.mxu0 0
    %441 = vmatprep.subr.bf16.mxu0 0
    %442 = vmatpush1.bf16.msra.mxu0 0
    %443 = vmatprep.subr.bf16.mxu0 0
    %444 = vmatpush1.bf16.msra.mxu0 0
    %445 = vmatprep.subr.bf16.mxu0 0
    %446 = vmatpush1.bf16.msra.mxu0 0
    %447 = vmatprep.subr.bf16.mxu0 0
    %448 = vmatpush1.bf16.msra.mxu0 0
    %449 = vmatprep.subr.bf16.mxu0 0
    %450 = vmatpush1.bf16.msra.mxu0 0
    %451 = vmatprep.subr.bf16.mxu0 0
    %452 = vmatpush1.bf16.msra.mxu0 0
    %453 = vmatprep.mubr.bf16.mxu0 0
    %454 = vmatmul.mubr.bf16.gmra.mrb[0].mxu0 %v369
    %v455 = vpop.f32.mrb[0].mxu0
    %v456 = vadd.f32 %v359, %v455
    %v457 = vpop.f32.mrb[0].mxu0
    %v458 = vpop.f32.mrb[0].mxu0
    %v459 = vadd.f32 %v359, %v458
    %v460 = vpop.f32.mrb[0].mxu0
    %461 = vmatprep.mubr.bf16.mxu0 0
    %462 = vmatmul.mubr.bf16.gmra.mrb[0].mxu0 %v370
    %v463 = vpop.f32.mrb[0].mxu0
    %v464 = vadd.f32 %v359, %v463
    %v465 = vpop.f32.mrb[0].mxu0
    %v466 = vpop.f32.mrb[0].mxu0
    %v467 = vadd.f32 %v359, %v466
    %v468 = vpop.f32.mrb[0].mxu0
    %469 = vdwg.mxu0
    %470 = vst [vmem:[#allocation17] sm:$0xff] %v456
    %471 = vst [vmem:[#allocation17 + $0x8] sm:$0xff] %v459
    %472 = vst [vmem:[#allocation17 + $0x10] sm:$0xff] %v464
    %473 = vst [vmem:[#allocation17 + $0x18] sm:$0xff] %v467
    // Predicated region
    $region14: #{patch_embed_forward.2} parent=1 // pred_check
      _
    $region15: #{patch_embed_forward.2} parent=1 // pred_check_branch
      %475 = sbr.rel (0) target = $region17
    $region16: #{patch_embed_forward.2} parent=1 // pred_region
      %s477 = ssub.s32 512, 512
      %478 = vsyncadd [#allocation18], %s477
      %s479 = sshll.u32 [#allocation17], 4
      %s480 = int_to_ptr.vmem [resolvable:$true] %s479
      %485 = dma.vmem_to_hbm [thread:$0]  %s480, 512, %s5, [#allocation18], 128, 128, 8
    $region17: #{patch_embed_forward.2} parent=1 // pred_fallthru
      _
    // Predicated region
    $region18: #{patch_embed_forward.2} parent=1 // pred_check
      _
    $region19: #{patch_embed_forward.2} parent=1 // pred_check_branch
      %487 = sbr.rel (0) target = $region21
    $region20: #{patch_embed_forward.2} parent=1 // pred_region
      %488 = dma.done [#allocation18], 512
    $region21: #{patch_embed_forward.2} parent=1 // pred_fallthru
      _
    %489 = vsyncpa [#allocation18], 1

</llo_original>
